<compile_context>
chip_gen: v7x
topology: tpu7x:2x2x1
jax: 0.10.0
libtpu: 0.0.40
codegen_flags: <defaults>
</compile_context>

<pallas_src>
import jax
import jax.numpy as jnp
from jax.experimental import pallas as pl
from jax.experimental.pallas import tpu as pltpu

NUM_EMERGENCE_LAYERS = 5


def _qbn_kernel(
    x_ref,        # (TM, D)   f32  input tile
    wmem_ref,     # (D, D)    bf16 memory_processor weight with memory_field folded in
    bmem_ref,     # (1, D)    f32  memory_processor bias
    wsyn_ref,     # (D, D)    bf16 synaptic weights
    wem_ref,      # (L, D, D) bf16 stacked emergence-layer weights (in, out)
    bem_ref,      # (L, 1, D) f32  stacked emergence-layer biases
    wpat_ref,     # (1, D)    f32  pattern_recognition as a lane row
    q_out_ref,    # (TM, D)   f32  quantum_state
    bio_out_ref,  # (TM, D)   f32  bio_patterns
    em_out_ref,   # (TM, 1)   f32  emergence (scalar per batch row)
):
    x = x_ref[...]

    # --- QuantumMemory: (x * memory_field) @ W_mem + b_mem  (field folded into W) ---
    quantum_state = (
        jnp.dot(x.astype(jnp.bfloat16), wmem_ref[...],
                preferred_element_type=jnp.float32)
        + bmem_ref[...]
    )
    q_out_ref[...] = quantum_state

    # --- BiologicalSynapse: tanh(q @ W_syn) ---
    bio_patterns = jnp.tanh(
        jnp.dot(quantum_state.astype(jnp.bfloat16), wsyn_ref[...],
                preferred_element_type=jnp.float32)
    )
    bio_out_ref[...] = bio_patterns

    # --- EmergencePatterns: 5x relu(Linear) then dot with pattern vector ---
    h = bio_patterns
    for layer in range(NUM_EMERGENCE_LAYERS):
        h = jnp.maximum(
            jnp.dot(h.astype(jnp.bfloat16), wem_ref[layer],
                    preferred_element_type=jnp.float32)
            + bem_ref[layer],
            0.0,
        )
    # N=1 matmul would waste the MXU columns; VPU multiply + lane reduce instead.
    em_out_ref[...] = jnp.sum(h * wpat_ref[...], axis=-1, keepdims=True)


def init_params(key, dim: int):
    """Raw f32 parameters mirroring the PyTorch module's initializers/shapes."""
    keys = jax.random.split(key, 6 + 2 * NUM_EMERGENCE_LAYERS)
    bound = 1.0 / jnp.sqrt(dim)

    params = {
        # QuantumMemory
        "memory_field": jax.random.uniform(keys[0], (1, dim)) * 0.02,
        "w_mem": jax.random.uniform(keys[1], (dim, dim), minval=-bound, maxval=bound),
        "b_mem": jax.random.uniform(keys[2], (1, dim), minval=-bound, maxval=bound),
        # BiologicalSynapse: torch.rand -> uniform [0, 1)
        "w_syn": jax.random.uniform(keys[3], (dim, dim)),
        # EmergencePatterns
        "w_em": jnp.stack(
            [
                jax.random.uniform(keys[4 + i], (dim, dim), minval=-bound, maxval=bound)
                for i in range(NUM_EMERGENCE_LAYERS)
            ]
        ),
        "b_em": jnp.stack(
            [
                jax.random.uniform(
                    keys[4 + NUM_EMERGENCE_LAYERS + i], (1, dim),
                    minval=-bound, maxval=bound,
                )
                for i in range(NUM_EMERGENCE_LAYERS)
            ]
        ),
        "w_pat": jax.random.uniform(keys[4 + 2 * NUM_EMERGENCE_LAYERS], (dim,)),
    }
    return jax.tree_util.tree_map(lambda a: a.astype(jnp.float32), params)


def prepare_params(raw):
    """One-time parameter transform for the kernel: fold memory_field, cast bf16."""
    # (x * mf) @ W == x @ (mf.T * W): scale row i of W_mem by memory_field[0, i].
    w_mem_fused = (raw["memory_field"].T * raw["w_mem"]).astype(jnp.bfloat16)
    return {
        "w_mem": w_mem_fused,                              # bf16 (D, D)
        "b_mem": raw["b_mem"],                             # f32  (1, D)
        "w_syn": raw["w_syn"].astype(jnp.bfloat16),        # bf16 (D, D)
        "w_em": raw["w_em"].astype(jnp.bfloat16),          # bf16 (L, D, D)
        "b_em": raw["b_em"],                               # f32  (L, 1, D)
        "w_pat": raw["w_pat"].reshape(1, -1),              # f32  (1, D) lane row
    }


def quantum_biological_network(x, kparams):
    """Fused forward pass. x: (B, D) float32, kparams from prepare_params()."""
    B, D = x.shape
    L = NUM_EMERGENCE_LAYERS

    # Batch tile: multiple of 8 sublanes, capped at 256 to fill MXU rows on v6e/v7x.
    TILE_M = min(256, ((B + 7) // 8) * 8)
    Bp = ((B + TILE_M - 1) // TILE_M) * TILE_M
    xp = x if Bp == B else jnp.pad(x, ((0, Bp - B), (0, 0)))
    num_m = Bp // TILE_M

    # --- VMEM budget: double-buffered blocks + headroom for in-kernel temporaries ---
    f4, bf2 = 4, 2
    in_block_bytes = (
        TILE_M * D * f4            # x tile
        + 2 * D * D * bf2          # w_mem + w_syn
        + L * D * D * bf2          # w_em
        + (1 + L + 1) * D * f4     # b_mem + b_em + w_pat
    )
    out_block_bytes = 2 * TILE_M * D * f4 + TILE_M * f4
    vmem_limit = int(min(100 * 1024 * 1024,
                         max(32 * 1024 * 1024,
                             2 * (in_block_bytes + out_block_bytes) + 8 * 1024 * 1024)))

    # --- Cost estimate: 7 DxD matmuls + final lane reduction; tanh transcendentals ---
    flops = 2 * Bp * D * D * (2 + L) + 2 * Bp * D
    transcendentals = Bp * D
    bytes_accessed = (
        Bp * D * f4                       # x
        + (2 + L) * D * D * bf2           # weights
        + (1 + L + 1) * D * f4            # biases + pattern row
        + 2 * Bp * D * f4 + Bp * f4       # outputs
    )
    cost = pl.CostEstimate(flops=flops, transcendentals=transcendentals,
                           bytes_accessed=bytes_accessed)

    row_map = lambda i: (i, 0)
    const2 = lambda i: (0, 0)
    const3 = lambda i: (0, 0, 0)

    q, bio, em = pl.pallas_call(
        _qbn_kernel,
        out_shape=(
            jax.ShapeDtypeStruct((Bp, D), jnp.float32),  # quantum_state
            jax.ShapeDtypeStruct((Bp, D), jnp.float32),  # bio_patterns
            jax.ShapeDtypeStruct((Bp, 1), jnp.float32),  # emergence
        ),
        grid=(num_m,),
        in_specs=[
            pl.BlockSpec((TILE_M, D), row_map),   # x (pipelined per batch tile)
            pl.BlockSpec((D, D), const2),         # w_mem  (resident)
            pl.BlockSpec((1, D), const2),         # b_mem
            pl.BlockSpec((D, D), const2),         # w_syn
            pl.BlockSpec((L, D, D), const3),      # w_em
            pl.BlockSpec((L, 1, D), const3),      # b_em
            pl.BlockSpec((1, D), const2),         # w_pat
        ],
        out_specs=(
            pl.BlockSpec((TILE_M, D), row_map),
            pl.BlockSpec((TILE_M, D), row_map),
            pl.BlockSpec((TILE_M, 1), row_map),
        ),
        compiler_params=pltpu.CompilerParams(
            dimension_semantics=("parallel",),
            vmem_limit_bytes=vmem_limit,
        ),
        cost_estimate=cost,
    )(
        xp,
        kparams["w_mem"],
        kparams["b_mem"],
        kparams["w_syn"],
        kparams["w_em"],
        kparams["b_em"],
        kparams["w_pat"],
    )

    if Bp != B:
        q, bio, em = q[:B], bio[:B], em[:B]
    return {
        "quantum_state": q,
        "bio_patterns": bio,
        "emergence": em.reshape(B),
    }


def _reference(x, raw):
    """Pure-JAX f32 reference following the PyTorch graph exactly."""
    fi = x * raw["memory_field"]
    q = fi @ raw["w_mem"] + raw["b_mem"]
    bio = jnp.tanh(q @ raw["w_syn"])
    h = bio
    for layer in range(NUM_EMERGENCE_LAYERS):
        h = jnp.maximum(h @ raw["w_em"][layer] + raw["b_em"][layer], 0.0)
    em = h @ raw["w_pat"]
    return {"quantum_state": q, "bio_patterns": bio, "emergence": em}


if __name__ == "__main__":
    B, D = 8, 128  # small, TPU-tile-friendly shapes (batch=8, input_dim=128)
    key = jax.random.PRNGKey(0)
    k_x, k_p = jax.random.split(key)

    x = jax.random.normal(k_x, (B, D), dtype=jnp.float32)
    raw_params = init_params(k_p, D)
    kparams = prepare_params(raw_params)

    out = quantum_biological_network(x, kparams)
    jax.block_until_ready(out)

    ref = _reference(x, raw_params)
    # bf16 matmul operands on a 7-matmul chain -> loosen tolerance vs f32 reference.
    for name in ("quantum_state", "bio_patterns", "emergence"):
        assert out[name].shape == ref[name].shape, name
        assert jnp.allclose(out[name], ref[name], atol=5e-2, rtol=5e-2), name

    print("KERNEL_OK")
</pallas_src>

<mosaic_0001>
module attributes {stable_mosaic.version = 11 : i64} {
  func.func @_qbn_kernel(%arg0: i32, %arg1: memref<8x128xf32, #tpu.memory_space<vmem>>, %arg2: memref<128x128xbf16, #tpu.memory_space<vmem>>, %arg3: memref<1x128xf32, #tpu.memory_space<vmem>>, %arg4: memref<128x128xbf16, #tpu.memory_space<vmem>>, %arg5: memref<5x128x128xbf16, #tpu.memory_space<vmem>>, %arg6: memref<5x1x128xf32, #tpu.memory_space<vmem>>, %arg7: memref<1x128xf32, #tpu.memory_space<vmem>>, %arg8: memref<8x128xf32, #tpu.memory_space<vmem>>, %arg9: memref<8x128xf32, #tpu.memory_space<vmem>>, %arg10: memref<8x1xf32, #tpu.memory_space<vmem>>) attributes {dimension_semantics = [#tpu.dimension_semantics<parallel>], iteration_bounds = array<i64: 1>, scalar_prefetch = 0 : i64, scratch_operands = 0 : i64, tpu.core_type = #tpu.core_type<tc>, window_params = [{transform_indices = @transform_0, window_bounds = array<i64: 8, 128>}, {pipeline_mode = #tpu.pipeline_mode<synchronous>, transform_indices = @transform_1, window_bounds = array<i64: 128, 128>}, {pipeline_mode = #tpu.pipeline_mode<synchronous>, transform_indices = @transform_2, window_bounds = array<i64: 1, 128>}, {pipeline_mode = #tpu.pipeline_mode<synchronous>, transform_indices = @transform_3, window_bounds = array<i64: 128, 128>}, {pipeline_mode = #tpu.pipeline_mode<synchronous>, transform_indices = @transform_4, window_bounds = array<i64: 5, 128, 128>}, {pipeline_mode = #tpu.pipeline_mode<synchronous>, transform_indices = @transform_5, window_bounds = array<i64: 5, 1, 128>}, {pipeline_mode = #tpu.pipeline_mode<synchronous>, transform_indices = @transform_6, window_bounds = array<i64: 1, 128>}, {transform_indices = @transform_7, window_bounds = array<i64: 8, 128>}, {transform_indices = @transform_8, window_bounds = array<i64: 8, 128>}, {transform_indices = @transform_9, window_bounds = array<i64: 8, 1>}]} {
    %c0 = arith.constant 0 : index
    %c0_0 = arith.constant 0 : index
    %0 = vector.load %arg1[%c0, %c0_0] : memref<8x128xf32, #tpu.memory_space<vmem>>, vector<8x128xf32>
    %1 = arith.truncf %0 : vector<8x128xf32> to vector<8x128xbf16>
    %c0_1 = arith.constant 0 : index
    %c0_2 = arith.constant 0 : index
    %2 = vector.load %arg2[%c0_1, %c0_2] : memref<128x128xbf16, #tpu.memory_space<vmem>>, vector<128x128xbf16>
    %cst = arith.constant dense<0.000000e+00> : vector<8x128xf32>
    %3 = tpu.matmul %1, %2, %cst {dimension_numbers = #tpu.dot_dimension_numbers<[1], [0], [0], [1], [0, 0, 1, 1], [], []>} : vector<8x128xbf16>, vector<128x128xbf16>, vector<8x128xf32> -> vector<8x128xf32>
    %c0_3 = arith.constant 0 : index
    %c0_4 = arith.constant 0 : index
    %4 = vector.load %arg3[%c0_3, %c0_4] : memref<1x128xf32, #tpu.memory_space<vmem>>, vector<1x128xf32>
    %5 = vector.broadcast %4 : vector<1x128xf32> to vector<8x128xf32>
    %6 = arith.addf %3, %5 : vector<8x128xf32>
    %c0_5 = arith.constant 0 : index
    %c0_6 = arith.constant 0 : index
    %7 = vector.load %arg8[%c0_5, %c0_6] : memref<8x128xf32, #tpu.memory_space<vmem>>, vector<8x128xf32>
    tpu.vector_store %arg8[%c0_5, %c0_6], %6 {strides = array<i32>} : memref<8x128xf32, #tpu.memory_space<vmem>>, vector<8x128xf32>,
    %8 = arith.truncf %6 : vector<8x128xf32> to vector<8x128xbf16>
    %c0_7 = arith.constant 0 : index
    %c0_8 = arith.constant 0 : index
    %9 = vector.load %arg4[%c0_7, %c0_8] : memref<128x128xbf16, #tpu.memory_space<vmem>>, vector<128x128xbf16>
    %cst_9 = arith.constant dense<0.000000e+00> : vector<8x128xf32>
    %10 = tpu.matmul %8, %9, %cst_9 {dimension_numbers = #tpu.dot_dimension_numbers<[1], [0], [0], [1], [0, 0, 1, 1], [], []>} : vector<8x128xbf16>, vector<128x128xbf16>, vector<8x128xf32> -> vector<8x128xf32>
    %11 = math.tanh %10 : vector<8x128xf32>
    %c0_10 = arith.constant 0 : index
    %c0_11 = arith.constant 0 : index
    %12 = vector.load %arg9[%c0_10, %c0_11] : memref<8x128xf32, #tpu.memory_space<vmem>>, vector<8x128xf32>
    tpu.vector_store %arg9[%c0_10, %c0_11], %11 {strides = array<i32>} : memref<8x128xf32, #tpu.memory_space<vmem>>, vector<8x128xf32>,
    %13 = arith.truncf %11 : vector<8x128xf32> to vector<8x128xbf16>
    %c0_12 = arith.constant 0 : index
    %c0_13 = arith.constant 0 : index
    %c0_14 = arith.constant 0 : index
    %14 = vector.load %arg5[%c0_12, %c0_13, %c0_14] : memref<5x128x128xbf16, #tpu.memory_space<vmem>>, vector<1x128x128xbf16>
    %15 = vector.shape_cast %14 : vector<1x128x128xbf16> to vector<128x128xbf16>
    %cst_15 = arith.constant dense<0.000000e+00> : vector<8x128xf32>
    %16 = tpu.matmul %13, %15, %cst_15 {dimension_numbers = #tpu.dot_dimension_numbers<[1], [0], [0], [1], [0, 0, 1, 1], [], []>} : vector<8x128xbf16>, vector<128x128xbf16>, vector<8x128xf32> -> vector<8x128xf32>
    %c0_16 = arith.constant 0 : index
    %c0_17 = arith.constant 0 : index
    %c0_18 = arith.constant 0 : index
    %17 = vector.load %arg6[%c0_16, %c0_17, %c0_18] : memref<5x1x128xf32, #tpu.memory_space<vmem>>, vector<1x1x128xf32>
    %18 = vector.shape_cast %17 : vector<1x1x128xf32> to vector<1x128xf32>
    %19 = vector.broadcast %18 : vector<1x128xf32> to vector<8x128xf32>
    %20 = arith.addf %16, %19 : vector<8x128xf32>
    %cst_19 = arith.constant 0.000000e+00 : f32
    %21 = vector.broadcast %cst_19 : f32 to vector<8x128xf32>
    %22 = arith.maximumf %20, %21 : vector<8x128xf32>
    %23 = arith.truncf %22 : vector<8x128xf32> to vector<8x128xbf16>
    %c1 = arith.constant 1 : index
    %c0_20 = arith.constant 0 : index
    %c0_21 = arith.constant 0 : index
    %24 = vector.load %arg5[%c1, %c0_20, %c0_21] : memref<5x128x128xbf16, #tpu.memory_space<vmem>>, vector<1x128x128xbf16>
    %25 = vector.shape_cast %24 : vector<1x128x128xbf16> to vector<128x128xbf16>
    %cst_22 = arith.constant dense<0.000000e+00> : vector<8x128xf32>
    %26 = tpu.matmul %23, %25, %cst_22 {dimension_numbers = #tpu.dot_dimension_numbers<[1], [0], [0], [1], [0, 0, 1, 1], [], []>} : vector<8x128xbf16>, vector<128x128xbf16>, vector<8x128xf32> -> vector<8x128xf32>
    %c1_23 = arith.constant 1 : index
    %c0_24 = arith.constant 0 : index
    %c0_25 = arith.constant 0 : index
    %27 = vector.load %arg6[%c1_23, %c0_24, %c0_25] : memref<5x1x128xf32, #tpu.memory_space<vmem>>, vector<1x1x128xf32>
    %28 = vector.shape_cast %27 : vector<1x1x128xf32> to vector<1x128xf32>
    %29 = vector.broadcast %28 : vector<1x128xf32> to vector<8x128xf32>
    %30 = arith.addf %26, %29 : vector<8x128xf32>
    %cst_26 = arith.constant 0.000000e+00 : f32
    %31 = vector.broadcast %cst_26 : f32 to vector<8x128xf32>
    %32 = arith.maximumf %30, %31 : vector<8x128xf32>
    %33 = arith.truncf %32 : vector<8x128xf32> to vector<8x128xbf16>
    %c2 = arith.constant 2 : index
    %c0_27 = arith.constant 0 : index
    %c0_28 = arith.constant 0 : index
    %34 = vector.load %arg5[%c2, %c0_27, %c0_28] : memref<5x128x128xbf16, #tpu.memory_space<vmem>>, vector<1x128x128xbf16>
    %35 = vector.shape_cast %34 : vector<1x128x128xbf16> to vector<128x128xbf16>
    %cst_29 = arith.constant dense<0.000000e+00> : vector<8x128xf32>
    %36 = tpu.matmul %33, %35, %cst_29 {dimension_numbers = #tpu.dot_dimension_numbers<[1], [0], [0], [1], [0, 0, 1, 1], [], []>} : vector<8x128xbf16>, vector<128x128xbf16>, vector<8x128xf32> -> vector<8x128xf32>
    %c2_30 = arith.constant 2 : index
    %c0_31 = arith.constant 0 : index
    %c0_32 = arith.constant 0 : index
    %37 = vector.load %arg6[%c2_30, %c0_31, %c0_32] : memref<5x1x128xf32, #tpu.memory_space<vmem>>, vector<1x1x128xf32>
    %38 = vector.shape_cast %37 : vector<1x1x128xf32> to vector<1x128xf32>
    %39 = vector.broadcast %38 : vector<1x128xf32> to vector<8x128xf32>
    %40 = arith.addf %36, %39 : vector<8x128xf32>
    %cst_33 = arith.constant 0.000000e+00 : f32
    %41 = vector.broadcast %cst_33 : f32 to vector<8x128xf32>
    %42 = arith.maximumf %40, %41 : vector<8x128xf32>
    %43 = arith.truncf %42 : vector<8x128xf32> to vector<8x128xbf16>
    %c3 = arith.constant 3 : index
    %c0_34 = arith.constant 0 : index
    %c0_35 = arith.constant 0 : index
    %44 = vector.load %arg5[%c3, %c0_34, %c0_35] : memref<5x128x128xbf16, #tpu.memory_space<vmem>>, vector<1x128x128xbf16>
    %45 = vector.shape_cast %44 : vector<1x128x128xbf16> to vector<128x128xbf16>
    %cst_36 = arith.constant dense<0.000000e+00> : vector<8x128xf32>
    %46 = tpu.matmul %43, %45, %cst_36 {dimension_numbers = #tpu.dot_dimension_numbers<[1], [0], [0], [1], [0, 0, 1, 1], [], []>} : vector<8x128xbf16>, vector<128x128xbf16>, vector<8x128xf32> -> vector<8x128xf32>
    %c3_37 = arith.constant 3 : index
    %c0_38 = arith.constant 0 : index
    %c0_39 = arith.constant 0 : index
    %47 = vector.load %arg6[%c3_37, %c0_38, %c0_39] : memref<5x1x128xf32, #tpu.memory_space<vmem>>, vector<1x1x128xf32>
    %48 = vector.shape_cast %47 : vector<1x1x128xf32> to vector<1x128xf32>
    %49 = vector.broadcast %48 : vector<1x128xf32> to vector<8x128xf32>
    %50 = arith.addf %46, %49 : vector<8x128xf32>
    %cst_40 = arith.constant 0.000000e+00 : f32
    %51 = vector.broadcast %cst_40 : f32 to vector<8x128xf32>
    %52 = arith.maximumf %50, %51 : vector<8x128xf32>
    %53 = arith.truncf %52 : vector<8x128xf32> to vector<8x128xbf16>
    %c4 = arith.constant 4 : index
    %c0_41 = arith.constant 0 : index
    %c0_42 = arith.constant 0 : index
    %54 = vector.load %arg5[%c4, %c0_41, %c0_42] : memref<5x128x128xbf16, #tpu.memory_space<vmem>>, vector<1x128x128xbf16>
    %55 = vector.shape_cast %54 : vector<1x128x128xbf16> to vector<128x128xbf16>
    %cst_43 = arith.constant dense<0.000000e+00> : vector<8x128xf32>
    %56 = tpu.matmul %53, %55, %cst_43 {dimension_numbers = #tpu.dot_dimension_numbers<[1], [0], [0], [1], [0, 0, 1, 1], [], []>} : vector<8x128xbf16>, vector<128x128xbf16>, vector<8x128xf32> -> vector<8x128xf32>
    %c4_44 = arith.constant 4 : index
    %c0_45 = arith.constant 0 : index
    %c0_46 = arith.constant 0 : index
    %57 = vector.load %arg6[%c4_44, %c0_45, %c0_46] : memref<5x1x128xf32, #tpu.memory_space<vmem>>, vector<1x1x128xf32>
    %58 = vector.shape_cast %57 : vector<1x1x128xf32> to vector<1x128xf32>
    %59 = vector.broadcast %58 : vector<1x128xf32> to vector<8x128xf32>
    %60 = arith.addf %56, %59 : vector<8x128xf32>
    %cst_47 = arith.constant 0.000000e+00 : f32
    %61 = vector.broadcast %cst_47 : f32 to vector<8x128xf32>
    %62 = arith.maximumf %60, %61 : vector<8x128xf32>
    %c0_48 = arith.constant 0 : index
    %c0_49 = arith.constant 0 : index
    %63 = vector.load %arg7[%c0_48, %c0_49] : memref<1x128xf32, #tpu.memory_space<vmem>>, vector<1x128xf32>
    %64 = vector.broadcast %63 : vector<1x128xf32> to vector<8x128xf32>
    %65 = arith.mulf %62, %64 : vector<8x128xf32>
    %cst_50 = arith.constant dense<0.000000e+00> : vector<8xf32>
    %66 = vector.multi_reduction <add>, %65, %cst_50 [1] : vector<8x128xf32> to vector<8xf32>
    %67 = vector.shape_cast %66 : vector<8xf32> to vector<8x1xf32>
    %c0_51 = arith.constant 0 : index
    %c0_52 = arith.constant 0 : index
    %68 = vector.load %arg10[%c0_51, %c0_52] : memref<8x1xf32, #tpu.memory_space<vmem>>, vector<8x1xf32>
    tpu.vector_store %arg10[%c0_51, %c0_52], %67 {strides = array<i32>} : memref<8x1xf32, #tpu.memory_space<vmem>>, vector<8x1xf32>,
    return
  }
  func.func @transform_0(%arg0: i32) -> (i32, i32) {
    %c0_i32 = arith.constant 0 : i32
    %c0_i32_0 = arith.constant 0 : i32
    return %arg0, %c0_i32 : i32, i32
  }
  func.func @transform_1(%arg0: i32) -> (i32, i32) {
    %c0_i32 = arith.constant 0 : i32
    %c0_i32_0 = arith.constant 0 : i32
    %c0_i32_1 = arith.constant 0 : i32
    return %c0_i32, %c0_i32_0 : i32, i32
  }
  func.func @transform_2(%arg0: i32) -> (i32, i32) {
    %c0_i32 = arith.constant 0 : i32
    %c0_i32_0 = arith.constant 0 : i32
    %c0_i32_1 = arith.constant 0 : i32
    return %c0_i32, %c0_i32_0 : i32, i32
  }
  func.func @transform_3(%arg0: i32) -> (i32, i32) {
    %c0_i32 = arith.constant 0 : i32
    %c0_i32_0 = arith.constant 0 : i32
    %c0_i32_1 = arith.constant 0 : i32
    return %c0_i32, %c0_i32_0 : i32, i32
  }
  func.func @transform_4(%arg0: i32) -> (i32, i32, i32) {
    %c0_i32 = arith.constant 0 : i32
    %c0_i32_0 = arith.constant 0 : i32
    %c0_i32_1 = arith.constant 0 : i32
    %c0_i32_2 = arith.constant 0 : i32
    return %c0_i32, %c0_i32_0, %c0_i32_1 : i32, i32, i32
  }
  func.func @transform_5(%arg0: i32) -> (i32, i32, i32) {
    %c0_i32 = arith.constant 0 : i32
    %c0_i32_0 = arith.constant 0 : i32
    %c0_i32_1 = arith.constant 0 : i32
    %c0_i32_2 = arith.constant 0 : i32
    return %c0_i32, %c0_i32_0, %c0_i32_1 : i32, i32, i32
  }
  func.func @transform_6(%arg0: i32) -> (i32, i32) {
    %c0_i32 = arith.constant 0 : i32
    %c0_i32_0 = arith.constant 0 : i32
    %c0_i32_1 = arith.constant 0 : i32
    return %c0_i32, %c0_i32_0 : i32, i32
  }
  func.func @transform_7(%arg0: i32) -> (i32, i32) {
    %c0_i32 = arith.constant 0 : i32
    %c0_i32_0 = arith.constant 0 : i32
    return %arg0, %c0_i32 : i32, i32
  }
  func.func @transform_8(%arg0: i32) -> (i32, i32) {
    %c0_i32 = arith.constant 0 : i32
    %c0_i32_0 = arith.constant 0 : i32
    return %arg0, %c0_i32 : i32, i32
  }
  func.func @transform_9(%arg0: i32) -> (i32, i32) {
    %c0_i32 = arith.constant 0 : i32
    %c0_i32_0 = arith.constant 0 : i32
    return %arg0, %c0_i32 : i32, i32
  }
}

</mosaic_0001>

<llo_original>
// kernel: tpu_custom_call.1
$region0: #{tpu_custom_call.1}
  #allocation0 [shape = 'u32[]', space=smem, size = 0x4, offset = 0x4, fixed_abs, tag = 'smem constant byte address 0x4 - core index']
  #allocation1 [shape = 'u32[144,128]{1,0:T(1,128)}', space=vmem, size = 0x12000, scoped, tag = 'internal scratch']
  %s0 = inlined_call_operand.hbm [shape: f32[8,128], index: 0, kind: input, shape index: {}]
  %s1 = inlined_call_operand.hbm [shape: bf16[128,128], index: 1, kind: input, shape index: {}]
  %s2 = inlined_call_operand.vmem [shape: f32[1,128], index: 2, kind: input, shape index: {}]
  %s3 = inlined_call_operand.hbm [shape: bf16[128,128], index: 3, kind: input, shape index: {}]
  %s4 = inlined_call_operand.hbm [shape: bf16[5,128,128], index: 4, kind: input, shape index: {}]
  %s5 = inlined_call_operand.vmem [shape: f32[5,1,128], index: 5, kind: input, shape index: {}]
  %s6 = inlined_call_operand.vmem [shape: f32[1,128], index: 6, kind: input, shape index: {}]
  %s7 = inlined_call_operand.hbm [shape: f32[8,128], index: 7, kind: output, shape index: {0}]
  %s8 = inlined_call_operand.hbm [shape: f32[8,128], index: 8, kind: output, shape index: {1}]
  %s9 = inlined_call_operand.vmem [shape: f32[8,1], index: 9, kind: output, shape index: {2}]
  %10 = xla_tuple %s7, %s8, %s9
  %s11 = sld [smem:[#allocation0]]
  $region70: #{tpu_custom_call.1} parent=0
    _
  %s13 = ssub.s32 1, %s11
  %s14 = scalar_select 0, %s13, %s11
  $region1: #{tpu_custom_call.1} parent=0
    #allocation2 [shape = 'u8[4096]{0}', space=vmem, size = 0x1000, scoped, tag = 'input window, operand 0, single buffered']
    #allocation3 [shape = 's32[1]{0}', space=sflag, size = 0x4, scoped, tag = 'scoped memory for tpu_custom_call.1']
    #allocation4 [shape = 's32[1]{0}', space=sflag, size = 0x4, scoped, tag = 'scoped memory for tpu_custom_call.1']
    #allocation5 [shape = 'u8[32768]{0}', space=vmem, size = 0x8000, scoped, tag = 'input window, operand 1, single buffered']
    #allocation6 [shape = 's32[1]{0}', space=sflag, size = 0x4, scoped, tag = 'scoped memory for tpu_custom_call.1']
    #allocation7 [shape = 'u8[32768]{0}', space=vmem, size = 0x8000, scoped, tag = 'input window, operand 3, single buffered']
    #allocation8 [shape = 'u8[163840]{0}', space=vmem, size = 0x28000, scoped, tag = 'input window, operand 4, single buffered']
    #allocation9 [shape = 's32[1]{0}', space=sflag, size = 0x4, scoped, tag = 'scoped memory for tpu_custom_call.1']
    #allocation10 [shape = 'u8[4096]{0}', space=vmem, size = 0x1000, scoped, tag = 'output window, operand 0, single buffered']
    #allocation11 [shape = 'u8[4096]{0}', space=vmem, size = 0x1000, scoped, tag = 'output window, operand 1, single buffered']
    #allocation12 [shape = 's32[1]{0}', space=sflag, size = 0x4, scoped, tag = 'scoped memory for tpu_custom_call.1']
    %15 = vsyncpa [#allocation3], 0
    %16 = vsyncpa [#allocation6], 0
    %17 = vsyncpa [#allocation9], 0
    %18 = vsyncpa [#allocation4], 0
    %19 = vsyncpa [#allocation12], 0
    // Predicated region
    $region2: #{tpu_custom_call.1} parent=1 // pred_check
      _
    $region3: #{tpu_custom_call.1} parent=1 // pred_check_branch
      %21 = sbr.rel (0) target = $region5
    $region4: #{tpu_custom_call.1} parent=1 // pred_region
      %s23 = ssub.s32 128, 128
      %24 = vsyncadd [#allocation3], %s23
      %s26 = sshll.u32 [#allocation2], 4
      %s27 = int_to_ptr.vmem [resolvable:$true] %s26
      %29 = dma.hbm_to_vmem [thread:$0]  %s0, 128, %s27, [#allocation3]
    $region5: #{tpu_custom_call.1} parent=1 // pred_fallthru
      _
    // Predicated region
    $region6: #{tpu_custom_call.1} parent=1 // pred_check
      _
    $region7: #{tpu_custom_call.1} parent=1 // pred_check_branch
      %31 = sbr.rel (0) target = $region9
    $region8: #{tpu_custom_call.1} parent=1 // pred_region
      %s33 = ssub.s32 1024, 1024
      %34 = vsyncadd [#allocation6], %s33
      %s35 = sshll.u32 [#allocation5], 4
      %s36 = int_to_ptr.vmem [resolvable:$true] %s35
      %41 = dma.hbm_to_vmem [thread:$0]  %s1, 1024, %s36, [#allocation6], 64, 64, 4
    $region9: #{tpu_custom_call.1} parent=1 // pred_fallthru
      _
    // Predicated region
    $region10: #{tpu_custom_call.1} parent=1 // pred_check
      _
    $region11: #{tpu_custom_call.1} parent=1 // pred_check_branch
      %43 = sbr.rel (0) target = $region13
    $region12: #{tpu_custom_call.1} parent=1 // pred_region
      _
    $region13: #{tpu_custom_call.1} parent=1 // pred_fallthru
      _
    // Predicated region
    $region14: #{tpu_custom_call.1} parent=1 // pred_check
      _
    $region15: #{tpu_custom_call.1} parent=1 // pred_check_branch
      %45 = sbr.rel (0) target = $region17
    $region16: #{tpu_custom_call.1} parent=1 // pred_region
      %s47 = ssub.s32 1024, 1024
      %48 = vsyncadd [#allocation6], %s47
      %s49 = sshll.u32 [#allocation7], 4
      %s50 = int_to_ptr.vmem [resolvable:$true] %s49
      %55 = dma.hbm_to_vmem [thread:$0]  %s3, 1024, %s50, [#allocation6], 64, 64, 4
    $region17: #{tpu_custom_call.1} parent=1 // pred_fallthru
      _
    // Predicated region
    $region18: #{tpu_custom_call.1} parent=1 // pred_check
      _
    $region19: #{tpu_custom_call.1} parent=1 // pred_check_branch
      %57 = sbr.rel (0) target = $region21
    $region20: #{tpu_custom_call.1} parent=1 // pred_region
      %s59 = ssub.s32 5120, 5120
      %60 = vsyncadd [#allocation9], %s59
      %s61 = sshll.u32 [#allocation8], 4
      %s62 = int_to_ptr.vmem [resolvable:$true] %s61
      %67 = dma.hbm_to_vmem [thread:$0]  %s4, 5120, %s62, [#allocation9], 64, 64, 4
    $region21: #{tpu_custom_call.1} parent=1 // pred_fallthru
      _
    // Predicated region
    $region22: #{tpu_custom_call.1} parent=1 // pred_check
      _
    $region23: #{tpu_custom_call.1} parent=1 // pred_check_branch
      %69 = sbr.rel (0) target = $region25
    $region24: #{tpu_custom_call.1} parent=1 // pred_region
      _
    $region25: #{tpu_custom_call.1} parent=1 // pred_fallthru
      _
    // Predicated region
    $region26: #{tpu_custom_call.1} parent=1 // pred_check
      _
    $region27: #{tpu_custom_call.1} parent=1 // pred_check_branch
      %71 = sbr.rel (0) target = $region29
    $region28: #{tpu_custom_call.1} parent=1 // pred_region
      _
    $region29: #{tpu_custom_call.1} parent=1 // pred_fallthru
      _
    // Predicated region
    $region30: #{tpu_custom_call.1} parent=1 // pred_check
      _
    $region31: #{tpu_custom_call.1} parent=1 // pred_check_branch
      %73 = sbr.rel (0) target = $region33
    $region32: #{tpu_custom_call.1} parent=1 // pred_region
      %74 = dma.done [#allocation3], 128
    $region33: #{tpu_custom_call.1} parent=1 // pred_fallthru
      _
    // Predicated region
    $region34: #{tpu_custom_call.1} parent=1 // pred_check
      _
    $region35: #{tpu_custom_call.1} parent=1 // pred_check_branch
      %76 = sbr.rel (0) target = $region37
    $region36: #{tpu_custom_call.1} parent=1 // pred_region
      %77 = dma.done [#allocation6], 1024
    $region37: #{tpu_custom_call.1} parent=1 // pred_fallthru
      _
    // Predicated region
    $region38: #{tpu_custom_call.1} parent=1 // pred_check
      _
    $region39: #{tpu_custom_call.1} parent=1 // pred_check_branch
      %79 = sbr.rel (0) target = $region41
    $region40: #{tpu_custom_call.1} parent=1 // pred_region
      %80 = dma.done [#allocation6], 1024
    $region41: #{tpu_custom_call.1} parent=1 // pred_fallthru
      _
    // Predicated region
    $region42: #{tpu_custom_call.1} parent=1 // pred_check
      _
    $region43: #{tpu_custom_call.1} parent=1 // pred_check_branch
      %82 = sbr.rel (0) target = $region45
    $region44: #{tpu_custom_call.1} parent=1 // pred_region
      %83 = dma.done [#allocation9], 5120
    $region45: #{tpu_custom_call.1} parent=1 // pred_fallthru
      _
    %v85 = vld [vmem:[#allocation2] sm:$0xff]
    %v86 = vpack.c.bf16 %v85, %v85
    %v87 = vld [vmem:[#allocation5] sm:$0xf]
    %v88 = vld [vmem:[#allocation5 + $0x4] sm:$0xf]
    %v89 = vld [vmem:[#allocation5 + $0x8] sm:$0xf]
    %v90 = vld [vmem:[#allocation5 + $0xc] sm:$0xf]
    %v91 = vld [vmem:[#allocation5 + $0x10] sm:$0xf]
    %v92 = vld [vmem:[#allocation5 + $0x14] sm:$0xf]
    %v93 = vld [vmem:[#allocation5 + $0x18] sm:$0xf]
    %v94 = vld [vmem:[#allocation5 + $0x1c] sm:$0xf]
    %v95 = vld [vmem:[#allocation5 + $0x20] sm:$0xf]
    %v96 = vld [vmem:[#allocation5 + $0x24] sm:$0xf]
    %v97 = vld [vmem:[#allocation5 + $0x28] sm:$0xf]
    %v98 = vld [vmem:[#allocation5 + $0x2c] sm:$0xf]
    %v99 = vld [vmem:[#allocation5 + $0x30] sm:$0xf]
    %v100 = vld [vmem:[#allocation5 + $0x34] sm:$0xf]
    %v101 = vld [vmem:[#allocation5 + $0x38] sm:$0xf]
    %v102 = vld [vmem:[#allocation5 + $0x3c] sm:$0xf]
    %v103 = vld [vmem:[%s2] sm:$0x1]
    %v105 = vlaneseq
    %v106 = vshrl.u32 %v105, 7
    %v107 = vsub.s32 0, %v106
    %v108 = vrot.slane %v103, %v107
    %v126 = vunpack.c.l.b16 %v87
    %v127 = vunpack.c.l.b16 %v88
    %v128 = vunpack.c.l.b16 %v89
    %v129 = vunpack.c.l.b16 %v90
    %v130 = vunpack.c.l.b16 %v91
    %v131 = vunpack.c.l.b16 %v92
    %v132 = vunpack.c.l.b16 %v93
    %v133 = vunpack.c.l.b16 %v94
    %v134 = vunpack.c.l.b16 %v95
    %v135 = vunpack.c.l.b16 %v96
    %v136 = vunpack.c.l.b16 %v97
    %v137 = vunpack.c.l.b16 %v98
    %v138 = vunpack.c.l.b16 %v99
    %v139 = vunpack.c.l.b16 %v100
    %v140 = vunpack.c.l.b16 %v101
    %v141 = vunpack.c.l.b16 %v102
    %v142 = vpack.c.b16 %v127, %v126
    %v143 = vpack.c.b16 %v129, %v128
    %v144 = vpack.c.b16 %v131, %v130
    %v145 = vpack.c.b16 %v133, %v132
    %v146 = vpack.c.b16 %v135, %v134
    %v147 = vpack.c.b16 %v137, %v136
    %v148 = vpack.c.b16 %v139, %v138
    %v149 = vpack.c.b16 %v141, %v140
    %158 = vmatprep.subr.bf16.mxu0 0
    %159 = vmatpush1.bf16.msra.mxu0 %v142
    %160 = vmatprep.subr.bf16.mxu0 0
    %161 = vmatpush1.bf16.msra.mxu0 %v143
    %162 = vmatprep.subr.bf16.mxu0 0
    %163 = vmatpush1.bf16.msra.mxu0 %v144
    %164 = vmatprep.subr.bf16.mxu0 0
    %165 = vmatpush1.bf16.msra.mxu0 %v145
    %166 = vmatprep.subr.bf16.mxu0 0
    %167 = vmatpush1.bf16.msra.mxu0 %v146
    %168 = vmatprep.subr.bf16.mxu0 0
    %169 = vmatpush1.bf16.msra.mxu0 %v147
    %170 = vmatprep.subr.bf16.mxu0 0
    %171 = vmatpush1.bf16.msra.mxu0 %v148
    %172 = vmatprep.subr.bf16.mxu0 0
    %173 = vmatpush1.bf16.msra.mxu0 %v149
    %174 = vmatprep.subr.bf16.mxu0 0
    %175 = vmatpush1.bf16.msra.mxu0 0
    %176 = vmatprep.subr.bf16.mxu0 0
    %177 = vmatpush1.bf16.msra.mxu0 0
    %178 = vmatprep.subr.bf16.mxu0 0
    %179 = vmatpush1.bf16.msra.mxu0 0
    %180 = vmatprep.subr.bf16.mxu0 0
    %181 = vmatpush1.bf16.msra.mxu0 0
    %182 = vmatprep.subr.bf16.mxu0 0
    %183 = vmatpush1.bf16.msra.mxu0 0
    %184 = vmatprep.subr.bf16.mxu0 0
    %185 = vmatpush1.bf16.msra.mxu0 0
    %186 = vmatprep.subr.bf16.mxu0 0
    %187 = vmatpush1.bf16.msra.mxu0 0
    %188 = vmatprep.subr.bf16.mxu0 0
    %189 = vmatpush1.bf16.msra.mxu0 0
    %190 = vmatprep.mubr.bf16.mxu0 0
    %191 = vmatmul.mubr.bf16.gmra.mrb[0].mxu0 %v86
    %v192 = vpop.f32.mrb[0].mxu0
    %v193 = vadd.f32 %v108, %v192
    %v194 = vpop.f32.mrb[0].mxu0
    %v195 = vpop.f32.mrb[0].mxu0
    %v196 = vpop.f32.mrb[0].mxu0
    %197 = vdwg.mxu0
    %198 = vst [vmem:[#allocation10] sm:$0xff] %v193
    %v199 = vpack.c.bf16 %v193, %v193
    %v200 = vld [vmem:[#allocation7] sm:$0xf]
    %v201 = vld [vmem:[#allocation7 + $0x4] sm:$0xf]
    %v202 = vld [vmem:[#allocation7 + $0x8] sm:$0xf]
    %v203 = vld [vmem:[#allocation7 + $0xc] sm:$0xf]
    %v204 = vld [vmem:[#allocation7 + $0x10] sm:$0xf]
    %v205 = vld [vmem:[#allocation7 + $0x14] sm:$0xf]
    %v206 = vld [vmem:[#allocation7 + $0x18] sm:$0xf]
    %v207 = vld [vmem:[#allocation7 + $0x1c] sm:$0xf]
    %v208 = vld [vmem:[#allocation7 + $0x20] sm:$0xf]
    %v209 = vld [vmem:[#allocation7 + $0x24] sm:$0xf]
    %v210 = vld [vmem:[#allocation7 + $0x28] sm:$0xf]
    %v211 = vld [vmem:[#allocation7 + $0x2c] sm:$0xf]
    %v212 = vld [vmem:[#allocation7 + $0x30] sm:$0xf]
    %v213 = vld [vmem:[#allocation7 + $0x34] sm:$0xf]
    %v214 = vld [vmem:[#allocation7 + $0x38] sm:$0xf]
    %v215 = vld [vmem:[#allocation7 + $0x3c] sm:$0xf]
    %v232 = vunpack.c.l.b16 %v200
    %v233 = vunpack.c.l.b16 %v201
    %v234 = vunpack.c.l.b16 %v202
    %v235 = vunpack.c.l.b16 %v203
    %v236 = vunpack.c.l.b16 %v204
    %v237 = vunpack.c.l.b16 %v205
    %v238 = vunpack.c.l.b16 %v206
    %v239 = vunpack.c.l.b16 %v207
    %v240 = vunpack.c.l.b16 %v208
    %v241 = vunpack.c.l.b16 %v209
    %v242 = vunpack.c.l.b16 %v210
    %v243 = vunpack.c.l.b16 %v211
    %v244 = vunpack.c.l.b16 %v212
    %v245 = vunpack.c.l.b16 %v213
    %v246 = vunpack.c.l.b16 %v214
    %v247 = vunpack.c.l.b16 %v215
    %v248 = vpack.c.b16 %v233, %v232
    %v249 = vpack.c.b16 %v235, %v234
    %v250 = vpack.c.b16 %v237, %v236
    %v251 = vpack.c.b16 %v239, %v238
    %v252 = vpack.c.b16 %v241, %v240
    %v253 = vpack.c.b16 %v243, %v242
    %v254 = vpack.c.b16 %v245, %v244
    %v255 = vpack.c.b16 %v247, %v246
    %264 = vmatprep.subr.bf16.mxu0 0
    %265 = vmatpush1.bf16.msra.mxu0 %v248
    %266 = vmatprep.subr.bf16.mxu0 0
    %267 = vmatpush1.bf16.msra.mxu0 %v249
    %268 = vmatprep.subr.bf16.mxu0 0
    %269 = vmatpush1.bf16.msra.mxu0 %v250
    %270 = vmatprep.subr.bf16.mxu0 0
    %271 = vmatpush1.bf16.msra.mxu0 %v251
    %272 = vmatprep.subr.bf16.mxu0 0
    %273 = vmatpush1.bf16.msra.mxu0 %v252
    %274 = vmatprep.subr.bf16.mxu0 0
    %275 = vmatpush1.bf16.msra.mxu0 %v253
    %276 = vmatprep.subr.bf16.mxu0 0
    %277 = vmatpush1.bf16.msra.mxu0 %v254
    %278 = vmatprep.subr.bf16.mxu0 0
    %279 = vmatpush1.bf16.msra.mxu0 %v255
    %280 = vmatprep.subr.bf16.mxu0 0
    %281 = vmatpush1.bf16.msra.mxu0 0
    %282 = vmatprep.subr.bf16.mxu0 0
    %283 = vmatpush1.bf16.msra.mxu0 0
    %284 = vmatprep.subr.bf16.mxu0 0
    %285 = vmatpush1.bf16.msra.mxu0 0
    %286 = vmatprep.subr.bf16.mxu0 0
    %287 = vmatpush1.bf16.msra.mxu0 0
    %288 = vmatprep.subr.bf16.mxu0 0
    %289 = vmatpush1.bf16.msra.mxu0 0
    %290 = vmatprep.subr.bf16.mxu0 0
    %291 = vmatpush1.bf16.msra.mxu0 0
    %292 = vmatprep.subr.bf16.mxu0 0
    %293 = vmatpush1.bf16.msra.mxu0 0
    %294 = vmatprep.subr.bf16.mxu0 0
    %295 = vmatpush1.bf16.msra.mxu0 0
    %296 = vmatprep.mubr.bf16.mxu0 0
    %297 = vmatmul.mubr.bf16.gmra.mrb[0].mxu0 %v199
    %v298 = vpop.f32.mrb[0].mxu0
    %v299 = vadd.f32 0.0, %v298
    %v300 = vpop.f32.mrb[0].mxu0
    %v301 = vpop.f32.mrb[0].mxu0
    %v302 = vpop.f32.mrb[0].mxu0
    %303 = vdwg.mxu0
    %v304 = vtanh.pop %v299
    %305 = vst [vmem:[#allocation11] sm:$0xff] %v304
    %v306 = vpack.c.bf16 %v304, %v304
    %v307 = vld [vmem:[#allocation8] sm:$0xf]
    %v308 = vld [vmem:[#allocation8 + $0x4] sm:$0xf]
    %v309 = vld [vmem:[#allocation8 + $0x8] sm:$0xf]
    %v310 = vld [vmem:[#allocation8 + $0xc] sm:$0xf]
    %v311 = vld [vmem:[#allocation8 + $0x10] sm:$0xf]
    %v312 = vld [vmem:[#allocation8 + $0x14] sm:$0xf]
    %v313 = vld [vmem:[#allocation8 + $0x18] sm:$0xf]
    %v314 = vld [vmem:[#allocation8 + $0x1c] sm:$0xf]
    %v315 = vld [vmem:[#allocation8 + $0x20] sm:$0xf]
    %v316 = vld [vmem:[#allocation8 + $0x24] sm:$0xf]
    %v317 = vld [vmem:[#allocation8 + $0x28] sm:$0xf]
    %v318 = vld [vmem:[#allocation8 + $0x2c] sm:$0xf]
    %v319 = vld [vmem:[#allocation8 + $0x30] sm:$0xf]
    %v320 = vld [vmem:[#allocation8 + $0x34] sm:$0xf]
    %v321 = vld [vmem:[#allocation8 + $0x38] sm:$0xf]
    %v322 = vld [vmem:[#allocation8 + $0x3c] sm:$0xf]
    %v323 = vld [vmem:[%s5] sm:$0x1]
    %v325 = vlaneseq
    %v326 = vshrl.u32 %v325, 7
    %v327 = vsub.s32 0, %v326
    %v328 = vrot.slane %v323, %v327
    %v346 = vunpack.c.l.b16 %v307
    %v347 = vunpack.c.l.b16 %v308
    %v348 = vunpack.c.l.b16 %v309
    %v349 = vunpack.c.l.b16 %v310
    %v350 = vunpack.c.l.b16 %v311
    %v351 = vunpack.c.l.b16 %v312
    %v352 = vunpack.c.l.b16 %v313
    %v353 = vunpack.c.l.b16 %v314
    %v354 = vunpack.c.l.b16 %v315
    %v355 = vunpack.c.l.b16 %v316
    %v356 = vunpack.c.l.b16 %v317
    %v357 = vunpack.c.l.b16 %v318
    %v358 = vunpack.c.l.b16 %v319
    %v359 = vunpack.c.l.b16 %v320
    %v360 = vunpack.c.l.b16 %v321
    %v361 = vunpack.c.l.b16 %v322
    %v362 = vpack.c.b16 %v347, %v346
    %v363 = vpack.c.b16 %v349, %v348
    %v364 = vpack.c.b16 %v351, %v350
    %v365 = vpack.c.b16 %v353, %v352
    %v366 = vpack.c.b16 %v355, %v354
    %v367 = vpack.c.b16 %v357, %v356
    %v368 = vpack.c.b16 %v359, %v358
    %v369 = vpack.c.b16 %v361, %v360
    %378 = vmatprep.subr.bf16.mxu0 0
    %379 = vmatpush1.bf16.msra.mxu0 %v362
    %380 = vmatprep.subr.bf16.mxu0 0
    %381 = vmatpush1.bf16.msra.mxu0 %v363
    %382 = vmatprep.subr.bf16.mxu0 0
    %383 = vmatpush1.bf16.msra.mxu0 %v364
    %384 = vmatprep.subr.bf16.mxu0 0
    %385 = vmatpush1.bf16.msra.mxu0 %v365
    %386 = vmatprep.subr.bf16.mxu0 0
    %387 = vmatpush1.bf16.msra.mxu0 %v366
    %388 = vmatprep.subr.bf16.mxu0 0
    %389 = vmatpush1.bf16.msra.mxu0 %v367
    %390 = vmatprep.subr.bf16.mxu0 0
    %391 = vmatpush1.bf16.msra.mxu0 %v368
    %392 = vmatprep.subr.bf16.mxu0 0
    %393 = vmatpush1.bf16.msra.mxu0 %v369
    %394 = vmatprep.subr.bf16.mxu0 0
    %395 = vmatpush1.bf16.msra.mxu0 0
    %396 = vmatprep.subr.bf16.mxu0 0
    %397 = vmatpush1.bf16.msra.mxu0 0
    %398 = vmatprep.subr.bf16.mxu0 0
    %399 = vmatpush1.bf16.msra.mxu0 0
    %400 = vmatprep.subr.bf16.mxu0 0
    %401 = vmatpush1.bf16.msra.mxu0 0
    %402 = vmatprep.subr.bf16.mxu0 0
    %403 = vmatpush1.bf16.msra.mxu0 0
    %404 = vmatprep.subr.bf16.mxu0 0
    %405 = vmatpush1.bf16.msra.mxu0 0
    %406 = vmatprep.subr.bf16.mxu0 0
    %407 = vmatpush1.bf16.msra.mxu0 0
    %408 = vmatprep.subr.bf16.mxu0 0
    %409 = vmatpush1.bf16.msra.mxu0 0
    %410 = vmatprep.mubr.bf16.mxu0 0
    %411 = vmatmul.mubr.bf16.gmra.mrb[0].mxu0 %v306
    %v412 = vpop.f32.mrb[0].mxu0
    %v413 = vadd.f32 %v328, %v412
    %v414 = vpop.f32.mrb[0].mxu0
    %v415 = vpop.f32.mrb[0].mxu0
    %v416 = vpop.f32.mrb[0].mxu0
    %417 = vdwg.mxu0
    %v418 = vmax.f32 %v413, 0.0
    %v419 = vpack.c.bf16 %v418, %v418
    %s420 = scalar_lea.vmem [#allocation8], 64
    %v421 = vld [vmem:[%s420] sm:$0xf]
    %v422 = vld [vmem:[%s420 + $0x4] sm:$0xf]
    %v423 = vld [vmem:[%s420 + $0x8] sm:$0xf]
    %v424 = vld [vmem:[%s420 + $0xc] sm:$0xf]
    %v425 = vld [vmem:[%s420 + $0x10] sm:$0xf]
    %v426 = vld [vmem:[%s420 + $0x14] sm:$0xf]
    %v427 = vld [vmem:[%s420 + $0x18] sm:$0xf]
    %v428 = vld [vmem:[%s420 + $0x1c] sm:$0xf]
    %v429 = vld [vmem:[%s420 + $0x20] sm:$0xf]
    %v430 = vld [vmem:[%s420 + $0x24] sm:$0xf]
    %v431 = vld [vmem:[%s420 + $0x28] sm:$0xf]
    %v432 = vld [vmem:[%s420 + $0x2c] sm:$0xf]
    %v433 = vld [vmem:[%s420 + $0x30] sm:$0xf]
    %v434 = vld [vmem:[%s420 + $0x34] sm:$0xf]
    %v435 = vld [vmem:[%s420 + $0x38] sm:$0xf]
    %v436 = vld [vmem:[%s420 + $0x3c] sm:$0xf]
    %s437 = scalar_lea.vmem %s5, 1
    %v438 = vld [vmem:[%s437] sm:$0x1]
    %v440 = vlaneseq
    %v441 = vshrl.u32 %v440, 7
    %v442 = vsub.s32 0, %v441
    %v443 = vrot.slane %v438, %v442
    %v461 = vunpack.c.l.b16 %v421
    %v462 = vunpack.c.l.b16 %v422
    %v463 = vunpack.c.l.b16 %v423
    %v464 = vunpack.c.l.b16 %v424
    %v465 = vunpack.c.l.b16 %v425
    %v466 = vunpack.c.l.b16 %v426
    %v467 = vunpack.c.l.b16 %v427
    %v468 = vunpack.c.l.b16 %v428
    %v469 = vunpack.c.l.b16 %v429
    %v470 = vunpack.c.l.b16 %v430
    %v471 = vunpack.c.l.b16 %v431
    %v472 = vunpack.c.l.b16 %v432
    %v473 = vunpack.c.l.b16 %v433
    %v474 = vunpack.c.l.b16 %v434
    %v475 = vunpack.c.l.b16 %v435
    %v476 = vunpack.c.l.b16 %v436
    %v477 = vpack.c.b16 %v462, %v461
    %v478 = vpack.c.b16 %v464, %v463
    %v479 = vpack.c.b16 %v466, %v465
    %v480 = vpack.c.b16 %v468, %v467
    %v481 = vpack.c.b16 %v470, %v469
    %v482 = vpack.c.b16 %v472, %v471
    %v483 = vpack.c.b16 %v474, %v473
    %v484 = vpack.c.b16 %v476, %v475
    %493 = vmatprep.subr.bf16.mxu0 0
    %494 = vmatpush1.bf16.msra.mxu0 %v477
    %495 = vmatprep.subr.bf16.mxu0 0
    %496 = vmatpush1.bf16.msra.mxu0 %v478
    %497 = vmatprep.subr.bf16.mxu0 0
    %498 = vmatpush1.bf16.msra.mxu0 %v479
    %499 = vmatprep.subr.bf16.mxu0 0
    %500 = vmatpush1.bf16.msra.mxu0 %v480
    %501 = vmatprep.subr.bf16.mxu0 0
    %502 = vmatpush1.bf16.msra.mxu0 %v481
    %503 = vmatprep.subr.bf16.mxu0 0
    %504 = vmatpush1.bf16.msra.mxu0 %v482
    %505 = vmatprep.subr.bf16.mxu0 0
    %506 = vmatpush1.bf16.msra.mxu0 %v483
    %507 = vmatprep.subr.bf16.mxu0 0
    %508 = vmatpush1.bf16.msra.mxu0 %v484
    %509 = vmatprep.subr.bf16.mxu0 0
    %510 = vmatpush1.bf16.msra.mxu0 0
    %511 = vmatprep.subr.bf16.mxu0 0
    %512 = vmatpush1.bf16.msra.mxu0 0
    %513 = vmatprep.subr.bf16.mxu0 0
    %514 = vmatpush1.bf16.msra.mxu0 0
    %515 = vmatprep.subr.bf16.mxu0 0
    %516 = vmatpush1.bf16.msra.mxu0 0
    %517 = vmatprep.subr.bf16.mxu0 0
    %518 = vmatpush1.bf16.msra.mxu0 0
    %519 = vmatprep.subr.bf16.mxu0 0
    %520 = vmatpush1.bf16.msra.mxu0 0
    %521 = vmatprep.subr.bf16.mxu0 0
    %522 = vmatpush1.bf16.msra.mxu0 0
    %523 = vmatprep.subr.bf16.mxu0 0
    %524 = vmatpush1.bf16.msra.mxu0 0
    %525 = vmatprep.mubr.bf16.mxu0 0
    %526 = vmatmul.mubr.bf16.gmra.mrb[0].mxu0 %v419
    %v527 = vpop.f32.mrb[0].mxu0
    %v528 = vadd.f32 %v443, %v527
    %v529 = vpop.f32.mrb[0].mxu0
    %v530 = vpop.f32.mrb[0].mxu0
    %v531 = vpop.f32.mrb[0].mxu0
    %532 = vdwg.mxu0
    %v533 = vmax.f32 %v528, 0.0
    %v534 = vpack.c.bf16 %v533, %v533
    %s535 = scalar_lea.vmem [#allocation8], 128
    %v536 = vld [vmem:[%s535] sm:$0xf]
    %v537 = vld [vmem:[%s535 + $0x4] sm:$0xf]
    %v538 = vld [vmem:[%s535 + $0x8] sm:$0xf]
    %v539 = vld [vmem:[%s535 + $0xc] sm:$0xf]
    %v540 = vld [vmem:[%s535 + $0x10] sm:$0xf]
    %v541 = vld [vmem:[%s535 + $0x14] sm:$0xf]
    %v542 = vld [vmem:[%s535 + $0x18] sm:$0xf]
    %v543 = vld [vmem:[%s535 + $0x1c] sm:$0xf]
    %v544 = vld [vmem:[%s535 + $0x20] sm:$0xf]
    %v545 = vld [vmem:[%s535 + $0x24] sm:$0xf]
    %v546 = vld [vmem:[%s535 + $0x28] sm:$0xf]
    %v547 = vld [vmem:[%s535 + $0x2c] sm:$0xf]
    %v548 = vld [vmem:[%s535 + $0x30] sm:$0xf]
    %v549 = vld [vmem:[%s535 + $0x34] sm:$0xf]
    %v550 = vld [vmem:[%s535 + $0x38] sm:$0xf]
    %v551 = vld [vmem:[%s535 + $0x3c] sm:$0xf]
    %s552 = scalar_lea.vmem %s5, 2
    %v553 = vld [vmem:[%s552] sm:$0x1]
    %v555 = vlaneseq
    %v556 = vshrl.u32 %v555, 7
    %v557 = vsub.s32 0, %v556
    %v558 = vrot.slane %v553, %v557
    %v576 = vunpack.c.l.b16 %v536
    %v577 = vunpack.c.l.b16 %v537
    %v578 = vunpack.c.l.b16 %v538
    %v579 = vunpack.c.l.b16 %v539
    %v580 = vunpack.c.l.b16 %v540
    %v581 = vunpack.c.l.b16 %v541
    %v582 = vunpack.c.l.b16 %v542
    %v583 = vunpack.c.l.b16 %v543
    %v584 = vunpack.c.l.b16 %v544
    %v585 = vunpack.c.l.b16 %v545
    %v586 = vunpack.c.l.b16 %v546
    %v587 = vunpack.c.l.b16 %v547
    %v588 = vunpack.c.l.b16 %v548
    %v589 = vunpack.c.l.b16 %v549
    %v590 = vunpack.c.l.b16 %v550
    %v591 = vunpack.c.l.b16 %v551
    %v592 = vpack.c.b16 %v577, %v576
    %v593 = vpack.c.b16 %v579, %v578
    %v594 = vpack.c.b16 %v581, %v580
    %v595 = vpack.c.b16 %v583, %v582
    %v596 = vpack.c.b16 %v585, %v584
    %v597 = vpack.c.b16 %v587, %v586
    %v598 = vpack.c.b16 %v589, %v588
    %v599 = vpack.c.b16 %v591, %v590
    %608 = vmatprep.subr.bf16.mxu0 0
    %609 = vmatpush1.bf16.msra.mxu0 %v592
    %610 = vmatprep.subr.bf16.mxu0 0
    %611 = vmatpush1.bf16.msra.mxu0 %v593
    %612 = vmatprep.subr.bf16.mxu0 0
    %613 = vmatpush1.bf16.msra.mxu0 %v594
    %614 = vmatprep.subr.bf16.mxu0 0
    %615 = vmatpush1.bf16.msra.mxu0 %v595
    %616 = vmatprep.subr.bf16.mxu0 0
    %617 = vmatpush1.bf16.msra.mxu0 %v596
    %618 = vmatprep.subr.bf16.mxu0 0
    %619 = vmatpush1.bf16.msra.mxu0 %v597
    %620 = vmatprep.subr.bf16.mxu0 0
    %621 = vmatpush1.bf16.msra.mxu0 %v598
    %622 = vmatprep.subr.bf16.mxu0 0
    %623 = vmatpush1.bf16.msra.mxu0 %v599
    %624 = vmatprep.subr.bf16.mxu0 0
    %625 = vmatpush1.bf16.msra.mxu0 0
    %626 = vmatprep.subr.bf16.mxu0 0
    %627 = vmatpush1.bf16.msra.mxu0 0
    %628 = vmatprep.subr.bf16.mxu0 0
    %629 = vmatpush1.bf16.msra.mxu0 0
    %630 = vmatprep.subr.bf16.mxu0 0
    %631 = vmatpush1.bf16.msra.mxu0 0
    %632 = vmatprep.subr.bf16.mxu0 0
    %633 = vmatpush1.bf16.msra.mxu0 0
    %634 = vmatprep.subr.bf16.mxu0 0
    %635 = vmatpush1.bf16.msra.mxu0 0
    %636 = vmatprep.subr.bf16.mxu0 0
    %637 = vmatpush1.bf16.msra.mxu0 0
    %638 = vmatprep.subr.bf16.mxu0 0
    %639 = vmatpush1.bf16.msra.mxu0 0
    %640 = vmatprep.mubr.bf16.mxu0 0
    %641 = vmatmul.mubr.bf16.gmra.mrb[0].mxu0 %v534
    %v642 = vpop.f32.mrb[0].mxu0
    %v643 = vadd.f32 %v558, %v642
    %v644 = vpop.f32.mrb[0].mxu0
    %v645 = vpop.f32.mrb[0].mxu0
    %v646 = vpop.f32.mrb[0].mxu0
    %647 = vdwg.mxu0
    %v648 = vmax.f32 %v643, 0.0
    %v649 = vpack.c.bf16 %v648, %v648
    %s650 = scalar_lea.vmem [#allocation8], 192
    %v651 = vld [vmem:[%s650] sm:$0xf]
    %v652 = vld [vmem:[%s650 + $0x4] sm:$0xf]
    %v653 = vld [vmem:[%s650 + $0x8] sm:$0xf]
    %v654 = vld [vmem:[%s650 + $0xc] sm:$0xf]
    %v655 = vld [vmem:[%s650 + $0x10] sm:$0xf]
    %v656 = vld [vmem:[%s650 + $0x14] sm:$0xf]
    %v657 = vld [vmem:[%s650 + $0x18] sm:$0xf]
    %v658 = vld [vmem:[%s650 + $0x1c] sm:$0xf]
    %v659 = vld [vmem:[%s650 + $0x20] sm:$0xf]
    %v660 = vld [vmem:[%s650 + $0x24] sm:$0xf]
    %v661 = vld [vmem:[%s650 + $0x28] sm:$0xf]
    %v662 = vld [vmem:[%s650 + $0x2c] sm:$0xf]
    %v663 = vld [vmem:[%s650 + $0x30] sm:$0xf]
    %v664 = vld [vmem:[%s650 + $0x34] sm:$0xf]
    %v665 = vld [vmem:[%s650 + $0x38] sm:$0xf]
    %v666 = vld [vmem:[%s650 + $0x3c] sm:$0xf]
    %s667 = scalar_lea.vmem %s5, 3
    %v668 = vld [vmem:[%s667] sm:$0x1]
    %v670 = vlaneseq
    %v671 = vshrl.u32 %v670, 7
    %v672 = vsub.s32 0, %v671
    %v673 = vrot.slane %v668, %v672
    %v691 = vunpack.c.l.b16 %v651
    %v692 = vunpack.c.l.b16 %v652
    %v693 = vunpack.c.l.b16 %v653
    %v694 = vunpack.c.l.b16 %v654
    %v695 = vunpack.c.l.b16 %v655
    %v696 = vunpack.c.l.b16 %v656
    %v697 = vunpack.c.l.b16 %v657
    %v698 = vunpack.c.l.b16 %v658
    %v699 = vunpack.c.l.b16 %v659
    %v700 = vunpack.c.l.b16 %v660
    %v701 = vunpack.c.l.b16 %v661
    %v702 = vunpack.c.l.b16 %v662
    %v703 = vunpack.c.l.b16 %v663
    %v704 = vunpack.c.l.b16 %v664
    %v705 = vunpack.c.l.b16 %v665
    %v706 = vunpack.c.l.b16 %v666
    %v707 = vpack.c.b16 %v692, %v691
    %v708 = vpack.c.b16 %v694, %v693
    %v709 = vpack.c.b16 %v696, %v695
    %v710 = vpack.c.b16 %v698, %v697
    %v711 = vpack.c.b16 %v700, %v699
    %v712 = vpack.c.b16 %v702, %v701
    %v713 = vpack.c.b16 %v704, %v703
    %v714 = vpack.c.b16 %v706, %v705
    %723 = vmatprep.subr.bf16.mxu0 0
    %724 = vmatpush1.bf16.msra.mxu0 %v707
    %725 = vmatprep.subr.bf16.mxu0 0
    %726 = vmatpush1.bf16.msra.mxu0 %v708
    %727 = vmatprep.subr.bf16.mxu0 0
    %728 = vmatpush1.bf16.msra.mxu0 %v709
    %729 = vmatprep.subr.bf16.mxu0 0
    %730 = vmatpush1.bf16.msra.mxu0 %v710
    %731 = vmatprep.subr.bf16.mxu0 0
    %732 = vmatpush1.bf16.msra.mxu0 %v711
    %733 = vmatprep.subr.bf16.mxu0 0
    %734 = vmatpush1.bf16.msra.mxu0 %v712
    %735 = vmatprep.subr.bf16.mxu0 0
    %736 = vmatpush1.bf16.msra.mxu0 %v713
    %737 = vmatprep.subr.bf16.mxu0 0
    %738 = vmatpush1.bf16.msra.mxu0 %v714
    %739 = vmatprep.subr.bf16.mxu0 0
    %740 = vmatpush1.bf16.msra.mxu0 0
    %741 = vmatprep.subr.bf16.mxu0 0
    %742 = vmatpush1.bf16.msra.mxu0 0
    %743 = vmatprep.subr.bf16.mxu0 0
    %744 = vmatpush1.bf16.msra.mxu0 0
    %745 = vmatprep.subr.bf16.mxu0 0
    %746 = vmatpush1.bf16.msra.mxu0 0
    %747 = vmatprep.subr.bf16.mxu0 0
    %748 = vmatpush1.bf16.msra.mxu0 0
    %749 = vmatprep.subr.bf16.mxu0 0
    %750 = vmatpush1.bf16.msra.mxu0 0
    %751 = vmatprep.subr.bf16.mxu0 0
    %752 = vmatpush1.bf16.msra.mxu0 0
    %753 = vmatprep.subr.bf16.mxu0 0
    %754 = vmatpush1.bf16.msra.mxu0 0
    %755 = vmatprep.mubr.bf16.mxu0 0
    %756 = vmatmul.mubr.bf16.gmra.mrb[0].mxu0 %v649
    %v757 = vpop.f32.mrb[0].mxu0
    %v758 = vadd.f32 %v673, %v757
    %v759 = vpop.f32.mrb[0].mxu0
    %v760 = vpop.f32.mrb[0].mxu0
    %v761 = vpop.f32.mrb[0].mxu0
    %762 = vdwg.mxu0
    %v763 = vmax.f32 %v758, 0.0
    %v764 = vpack.c.bf16 %v763, %v763
    %s765 = scalar_lea.vmem [#allocation8], 256
    %v766 = vld [vmem:[%s765] sm:$0xf]
    %v767 = vld [vmem:[%s765 + $0x4] sm:$0xf]
    %v768 = vld [vmem:[%s765 + $0x8] sm:$0xf]
    %v769 = vld [vmem:[%s765 + $0xc] sm:$0xf]
    %v770 = vld [vmem:[%s765 + $0x10] sm:$0xf]
    %v771 = vld [vmem:[%s765 + $0x14] sm:$0xf]
    %v772 = vld [vmem:[%s765 + $0x18] sm:$0xf]
    %v773 = vld [vmem:[%s765 + $0x1c] sm:$0xf]
    %v774 = vld [vmem:[%s765 + $0x20] sm:$0xf]
    %v775 = vld [vmem:[%s765 + $0x24] sm:$0xf]
    %v776 = vld [vmem:[%s765 + $0x28] sm:$0xf]
    %v777 = vld [vmem:[%s765 + $0x2c] sm:$0xf]
    %v778 = vld [vmem:[%s765 + $0x30] sm:$0xf]
    %v779 = vld [vmem:[%s765 + $0x34] sm:$0xf]
    %v780 = vld [vmem:[%s765 + $0x38] sm:$0xf]
    %v781 = vld [vmem:[%s765 + $0x3c] sm:$0xf]
    %s782 = scalar_lea.vmem %s5, 4
    %v783 = vld [vmem:[%s782] sm:$0x1]
    %v785 = vlaneseq
    %v786 = vshrl.u32 %v785, 7
    %v787 = vsub.s32 0, %v786
    %v788 = vrot.slane %v783, %v787
    %v806 = vunpack.c.l.b16 %v766
    %v807 = vunpack.c.l.b16 %v767
    %v808 = vunpack.c.l.b16 %v768
    %v809 = vunpack.c.l.b16 %v769
    %v810 = vunpack.c.l.b16 %v770
    %v811 = vunpack.c.l.b16 %v771
    %v812 = vunpack.c.l.b16 %v772
    %v813 = vunpack.c.l.b16 %v773
    %v814 = vunpack.c.l.b16 %v774
    %v815 = vunpack.c.l.b16 %v775
    %v816 = vunpack.c.l.b16 %v776
    %v817 = vunpack.c.l.b16 %v777
    %v818 = vunpack.c.l.b16 %v778
    %v819 = vunpack.c.l.b16 %v779
    %v820 = vunpack.c.l.b16 %v780
    %v821 = vunpack.c.l.b16 %v781
    %v822 = vpack.c.b16 %v807, %v806
    %v823 = vpack.c.b16 %v809, %v808
    %v824 = vpack.c.b16 %v811, %v810
    %v825 = vpack.c.b16 %v813, %v812
    %v826 = vpack.c.b16 %v815, %v814
    %v827 = vpack.c.b16 %v817, %v816
    %v828 = vpack.c.b16 %v819, %v818
    %v829 = vpack.c.b16 %v821, %v820
    %838 = vmatprep.subr.bf16.mxu0 0
    %839 = vmatpush1.bf16.msra.mxu0 %v822
    %840 = vmatprep.subr.bf16.mxu0 0
    %841 = vmatpush1.bf16.msra.mxu0 %v823
    %842 = vmatprep.subr.bf16.mxu0 0
    %843 = vmatpush1.bf16.msra.mxu0 %v824
    %844 = vmatprep.subr.bf16.mxu0 0
    %845 = vmatpush1.bf16.msra.mxu0 %v825
    %846 = vmatprep.subr.bf16.mxu0 0
    %847 = vmatpush1.bf16.msra.mxu0 %v826
    %848 = vmatprep.subr.bf16.mxu0 0
    %849 = vmatpush1.bf16.msra.mxu0 %v827
    %850 = vmatprep.subr.bf16.mxu0 0
    %851 = vmatpush1.bf16.msra.mxu0 %v828
    %852 = vmatprep.subr.bf16.mxu0 0
    %853 = vmatpush1.bf16.msra.mxu0 %v829
    %854 = vmatprep.subr.bf16.mxu0 0
    %855 = vmatpush1.bf16.msra.mxu0 0
    %856 = vmatprep.subr.bf16.mxu0 0
    %857 = vmatpush1.bf16.msra.mxu0 0
    %858 = vmatprep.subr.bf16.mxu0 0
    %859 = vmatpush1.bf16.msra.mxu0 0
    %860 = vmatprep.subr.bf16.mxu0 0
    %861 = vmatpush1.bf16.msra.mxu0 0
    %862 = vmatprep.subr.bf16.mxu0 0
    %863 = vmatpush1.bf16.msra.mxu0 0
    %864 = vmatprep.subr.bf16.mxu0 0
    %865 = vmatpush1.bf16.msra.mxu0 0
    %866 = vmatprep.subr.bf16.mxu0 0
    %867 = vmatpush1.bf16.msra.mxu0 0
    %868 = vmatprep.subr.bf16.mxu0 0
    %869 = vmatpush1.bf16.msra.mxu0 0
    %870 = vmatprep.mubr.bf16.mxu0 0
    %871 = vmatmul.mubr.bf16.gmra.mrb[0].mxu0 %v764
    %v872 = vpop.f32.mrb[0].mxu0
    %v873 = vadd.f32 %v788, %v872
    %v874 = vpop.f32.mrb[0].mxu0
    %v875 = vpop.f32.mrb[0].mxu0
    %v876 = vpop.f32.mrb[0].mxu0
    %877 = vdwg.mxu0
    %v878 = vmax.f32 %v873, 0.0
    %v879 = vld [vmem:[%s6] sm:$0x1]
    %v881 = vlaneseq
    %v882 = vshrl.u32 %v881, 7
    %v883 = vsub.s32 0, %v882
    %v884 = vrot.slane %v879, %v883
    %v886 = vmul.f32 %v878, %v884
    %887 = vadd.xlane.f32.xlu0 %v886
    %v888 = vpop.xlane.xlu0 %887
    %vm889 = vcmask 7168
    %890 = vst.msk [vmem:[%s9] sm:$0xff] %vm889, %v888
    // Predicated region
    $region46: #{tpu_custom_call.1} parent=1 // pred_check
      _
    $region47: #{tpu_custom_call.1} parent=1 // pred_check_branch
      %892 = sbr.rel (0) target = $region49
    $region48: #{tpu_custom_call.1} parent=1 // pred_region
      %s894 = ssub.s32 128, 128
      %895 = vsyncadd [#allocation4], %s894
      %s897 = sshll.u32 [#allocation10], 4
      %s898 = int_to_ptr.vmem [resolvable:$true] %s897
      %900 = dma.vmem_to_hbm [thread:$0]  %s898, 128, %s7, [#allocation4]
    $region49: #{tpu_custom_call.1} parent=1 // pred_fallthru
      _
    // Predicated region
    $region50: #{tpu_custom_call.1} parent=1 // pred_check
      _
    $region51: #{tpu_custom_call.1} parent=1 // pred_check_branch
      %902 = sbr.rel (0) target = $region53
    $region52: #{tpu_custom_call.1} parent=1 // pred_region
      %s904 = ssub.s32 128, 128
      %905 = vsyncadd [#allocation12], %s904
      %s907 = sshll.u32 [#allocation11], 4
      %s908 = int_to_ptr.vmem [resolvable:$true] %s907
      %910 = dma.vmem_to_hbm [thread:$0]  %s908, 128, %s8, [#allocation12]
    $region53: #{tpu_custom_call.1} parent=1 // pred_fallthru
      _
    // Predicated region
    $region54: #{tpu_custom_call.1} parent=1 // pred_check
      _
    $region55: #{tpu_custom_call.1} parent=1 // pred_check_branch
      %912 = sbr.rel (0) target = $region57
    $region56: #{tpu_custom_call.1} parent=1 // pred_region
      _
    $region57: #{tpu_custom_call.1} parent=1 // pred_fallthru
      _
    // Predicated region
    $region58: #{tpu_custom_call.1} parent=1 // pred_check
      _
    $region59: #{tpu_custom_call.1} parent=1 // pred_check_branch
      %914 = sbr.rel (0) target = $region61
    $region60: #{tpu_custom_call.1} parent=1 // pred_region
      %915 = dma.done [#allocation4], 128
    $region61: #{tpu_custom_call.1} parent=1 // pred_fallthru
      _
    // Predicated region
    $region62: #{tpu_custom_call.1} parent=1 // pred_check
      _
    $region63: #{tpu_custom_call.1} parent=1 // pred_check_branch
      %917 = sbr.rel (0) target = $region65
    $region64: #{tpu_custom_call.1} parent=1 // pred_region
      %918 = dma.done [#allocation12], 128
    $region65: #{tpu_custom_call.1} parent=1 // pred_fallthru
      _
    // Predicated region
    $region66: #{tpu_custom_call.1} parent=1 // pred_check
      _
    $region67: #{tpu_custom_call.1} parent=1 // pred_check_branch
      %920 = sbr.rel (0) target = $region69
    $region68: #{tpu_custom_call.1} parent=1 // pred_region
      _
    $region69: #{tpu_custom_call.1} parent=1 // pred_fallthru
      _
    %921 = vsyncpa [#allocation3], 1
    %922 = vsyncpa [#allocation6], 1
    %923 = vsyncpa [#allocation9], 1
    %924 = vsyncpa [#allocation4], 1
    %925 = vsyncpa [#allocation12], 1

</llo_original>
